<compile_context>
chip_gen: v6e
topology: v6e:2x2x1
jax: 0.10.0
libtpu: 0.0.40
codegen_flags: <defaults>
</compile_context>

<pallas_src>
import math

import jax
import jax.numpy as jnp
from jax import lax
from jax.experimental import pallas as pl
from jax.experimental.pallas import tpu as pltpu


_VMEM_LIMIT_BYTES = 32 * 1024 * 1024   # explicit: v5e scoped default is 16 MiB
_VMEM_TILE_BUDGET = 24 * 1024 * 1024   # pipeline buffers; leaves 8 MiB headroom
_TARGET_OUT_BYTES = 4 * 1024 * 1024    # ~4 MiB of output per grid step (v7x)
_FLOOR_OUT_BYTES = 1 * 1024 * 1024     # never drop below ~1 MiB/step
_MAX_FOLD_W_BYTES = 1 << 20            # skip folding for pathological huge f


def _round_up(n, m):
    return ((n + m - 1) // m) * m


def _sublane_multiple(*dtypes):
    # (8,128) native tiling for 4-byte dtypes, (16,128) for 2-byte, (32,128) 1-byte.
    itemsize = min(jnp.dtype(d).itemsize for d in dtypes)
    return 8 * max(1, 4 // itemsize)


def _linear_rows_kernel(x_ref, w_ref, o_ref):
    """o = x @ w on the MXU.

    x_ref: (tm, Kf) row tile; w_ref: (Kf, Df) full (possibly block-diagonal
    folded) weight, VMEM-resident across the grid; o_ref: (tm, Df).

    The tiny-K contraction runs on the otherwise-idle MXU instead of an
    unrolled VPU FMA loop: at v7x HBM rates (or with bf16 output / a folded
    f>1 weight) the ~5 VALU ops + XLU lane-broadcast per output element would
    become the binding slot.  Structural zeros of the folded weight are free
    on the MXU; HIGHEST precision keeps f32 results faithful to nn.Linear.

    NOTE: the ragged last row block reads padded/garbage input rows; that is
    only safe because Pallas masks the corresponding output rows on store --
    do not remove that assumption.
    """
    o_ref[...] = jnp.dot(
        x_ref[...], w_ref[...],
        preferred_element_type=jnp.float32,
        precision=lax.Precision.HIGHEST,
    ).astype(o_ref.dtype)


def _choose_row_tile(Mf, Kf, Df, in_dtype, out_dtype, sub):
    """Row-tile size with correct (lane-padded) VMEM accounting.

    * target ~4 MiB of output per grid step (HBM-bound op; amortizes the
      ~0.35us/step overhead even at v7x bandwidth),
    * never below ~1 MiB/step, but shrink toward >= 8 grid steps so both v7x
      TensorCores get balanced work under dimension_semantics=("parallel",),
    * footprint counts: double-buffered lane-padded input tile, double-buffered
      output tile, the f32 dot temporary, and the resident weight buffers.
    """
    in_isz = jnp.dtype(in_dtype).itemsize
    out_isz = jnp.dtype(out_dtype).itemsize

    in_row = _round_up(Kf, 128) * in_isz          # (tm, Kf) pads Kf -> 128 lanes
    out_row = _round_up(Df, 128) * out_isz        # Df is a multiple of 128 when folded
    acc_row = _round_up(Df, 128) * 4              # f32 dot result before store cast
    per_row = 2 * in_row + 2 * out_row + acc_row
    w_bytes = 2 * _round_up(Kf, sub) * _round_up(Df, 128) * in_isz

    tm_budget = max(sub, (_VMEM_TILE_BUDGET - w_bytes) // per_row)
    tm_target = max(sub, _TARGET_OUT_BYTES // out_row)
    tm_floor = max(sub, _FLOOR_OUT_BYTES // out_row)

    if Mf >= 8 * tm_target:
        tm = tm_target                            # plenty of steps for both TCs
    else:
        tm = min(tm_target, max(tm_floor, pl.cdiv(Mf, 8)))
    tm = min(tm, tm_budget)
    tm = max(sub, (tm // sub) * sub)
    if tm >= Mf:
        tm = Mf                                   # single full-extent block (legal)
    return tm


def time_feature_embedding(x, weight, *, out_dtype=None):
    """nn.Linear(3, embed_dim, bias=False) applied over the last dim of x.

    x:      (B, L, K) with K == 3 time features.
    weight: (embed_dim, K) in PyTorch layout.
    Returns (B, L, embed_dim) in `out_dtype` (defaults to x.dtype).
    """
    B, L, K = x.shape
    D = weight.shape[0]
    assert weight.shape == (D, K)
    out_dtype = x.dtype if out_dtype is None else jnp.dtype(out_dtype)

    M = B * L
    in_isz = jnp.dtype(x.dtype).itemsize
    w_isz = jnp.dtype(weight.dtype).itemsize
    out_isz = jnp.dtype(out_dtype).itemsize

    # Lane-dense output: if D is not a multiple of 128 lanes, fold `f`
    # consecutive rows into the lane axis with a block-diagonal weight so every
    # kernel store is a full 128-lane vst (lane-dense output is the biggest
    # measured lever).  M is padded up to a multiple of f (a handful of
    # 12-byte rows) rather than falling back to masked stores; the padded
    # output rows are sliced off below.  Skip the fold only if the folded
    # weight itself would bloat VMEM (pathologically large f).
    if D % 128 == 0:
        f = 1
    else:
        f = 128 // math.gcd(D, 128)
        if _round_up(K * f, 8) * _round_up(D * f, 128) * w_isz > _MAX_FOLD_W_BYTES:
            f = 1
    M_pad = _round_up(M, f)
    Mf, Kf, Df = M_pad // f, K * f, D * f

    x_flat = x.reshape(M, K)
    if M_pad != M:
        x_flat = jnp.pad(x_flat, ((0, M_pad - M), (0, 0)))   # < f tiny zero rows
    x2d = x_flat.reshape(Mf, Kf)                  # contiguous reshape, no copy
    w_t = weight.T                                # (K, D)
    w_f = w_t if f == 1 else jnp.kron(jnp.eye(f, dtype=w_t.dtype), w_t)  # (Kf, Df)

    sub = _sublane_multiple(x.dtype, out_dtype)
    tm = _choose_row_tile(Mf, Kf, Df, x.dtype, out_dtype, sub)

    out = pl.pallas_call(
        _linear_rows_kernel,
        out_shape=jax.ShapeDtypeStruct((Mf, Df), out_dtype),
        grid=(pl.cdiv(Mf, tm),),                  # ragged last block is masked
        in_specs=[
            # TODO(synk): if xprof shows exposed input-DMA waits from this
            # narrow (tm, 3f) tile, raise its depth with
            # pipeline_mode=pl.Buffered(3) and add one more lane-padded input
            # buffer to the VMEM budget.
            pl.BlockSpec((tm, Kf), lambda i: (i, 0)),    # row tile of inputs
            pl.BlockSpec((Kf, Df), lambda i: (0, 0)),    # weight, VMEM-resident
        ],
        out_specs=pl.BlockSpec((tm, Df), lambda i: (i, 0)),
        compiler_params=pltpu.CompilerParams(
            # v7x: shard the row steps across the 2 TensorCores.
            dimension_semantics=("parallel",),
            # Explicit limit: the tiles can exceed v5e's 16 MiB scoped default;
            # 32 MiB fits physical VMEM on every generation (v7x: 64 MiB/TC).
            vmem_limit_bytes=_VMEM_LIMIT_BYTES,
        ),
        cost_estimate=pl.CostEstimate(
            flops=2 * M_pad * K * D,
            transcendentals=0,
            bytes_accessed=(Mf * Kf * in_isz + Kf * Df * w_isz
                            + Mf * Df * out_isz),
        ),
    )(x2d, w_f)

    out = out.reshape(M_pad, D)
    if M_pad != M:
        # TODO(synk): confirm XLA fuses this trailing-row slice into the
        # consumer instead of materializing an output copy.
        out = out[:M]
    return out.reshape(B, L, D)


if __name__ == "__main__":
    key = jax.random.PRNGKey(0)
    k_x, k_x2, k_w128, k_w32, k_w48 = jax.random.split(key, 5)

    def init_linear_weight(k, d_out, d_in):
        # matches nn.Linear(d_in, d_out, bias=False): U(-1/sqrt(d_in), 1/sqrt(d_in))
        bound = 1.0 / (d_in ** 0.5)
        return jax.random.uniform(k, (d_out, d_in), dtype=jnp.float32,
                                  minval=-bound, maxval=bound)

    K = 3                                   # temporal_dim
    ok = True

    # D=128: module default embed_dim, lane-dense directly (f=1).
    # D=32 : exercises the row->lane folding path (f=4), M divisible by f.
    x = jax.random.normal(k_x, (2, 16, K), dtype=jnp.float32)
    for d_embed, k_w in ((128, k_w128), (32, k_w32)):
        w = init_linear_weight(k_w, d_embed, K)
        y = jax.block_until_ready(time_feature_embedding(x, w))
        y_ref = jnp.einsum("blk,dk->bld", x, w)
        ok = ok and (y.shape == (2, 16, d_embed))
        ok = ok and bool(jnp.allclose(y, y_ref, atol=1e-5, rtol=1e-5))

    # D=48 (f=8) with M = 2*15 = 30 not divisible by f: exercises the
    # pad-M-to-multiple-of-f path (lane-dense stores kept, padded rows sliced).
    x2 = jax.random.normal(k_x2, (2, 15, K), dtype=jnp.float32)
    w48 = init_linear_weight(k_w48, 48, K)
    y2 = jax.block_until_ready(time_feature_embedding(x2, w48))
    y2_ref = jnp.einsum("blk,dk->bld", x2, w48)
    ok = ok and (y2.shape == (2, 15, 48))
    ok = ok and bool(jnp.allclose(y2, y2_ref, atol=1e-5, rtol=1e-5))

    assert ok
    print("KERNEL_OK")
</pallas_src>

<mosaic_0001>
module attributes {stable_mosaic.version = 11 : i64} {
  func.func @_linear_rows_kernel(%arg0: i32, %arg1: memref<32x3xf32, #tpu.memory_space<vmem>>, %arg2: memref<3x128xf32, #tpu.memory_space<vmem>>, %arg3: memref<32x128xf32, #tpu.memory_space<vmem>>) attributes {dimension_semantics = [#tpu.dimension_semantics<parallel>], iteration_bounds = array<i64: 1>, scalar_prefetch = 0 : i64, scratch_operands = 0 : i64, tpu.core_type = #tpu.core_type<tc>, window_params = [{transform_indices = @transform_0, window_bounds = array<i64: 32, 3>}, {pipeline_mode = #tpu.pipeline_mode<synchronous>, transform_indices = @transform_1, window_bounds = array<i64: 3, 128>}, {transform_indices = @transform_2, window_bounds = array<i64: 32, 128>}]} {
    %c0 = arith.constant 0 : index
    %c0_0 = arith.constant 0 : index
    %0 = vector.load %arg1[%c0, %c0_0] : memref<32x3xf32, #tpu.memory_space<vmem>>, vector<32x3xf32>
    %c0_1 = arith.constant 0 : index
    %c0_2 = arith.constant 0 : index
    %1 = vector.load %arg2[%c0_1, %c0_2] : memref<3x128xf32, #tpu.memory_space<vmem>>, vector<3x128xf32>
    %cst = arith.constant dense<0.000000e+00> : vector<32x128xf32>
    %2 = tpu.matmul %0, %1, %cst {dimension_numbers = #tpu.dot_dimension_numbers<[1], [0], [0], [1], [0, 0, 1, 1], [], []>, precision = #tpu.contract_precision<fp32>} : vector<32x3xf32>, vector<3x128xf32>, vector<32x128xf32> -> vector<32x128xf32>
    %c0_3 = arith.constant 0 : index
    %c0_4 = arith.constant 0 : index
    %3 = vector.load %arg3[%c0_3, %c0_4] : memref<32x128xf32, #tpu.memory_space<vmem>>, vector<32x128xf32>
    tpu.vector_store %arg3[%c0_3, %c0_4], %2 {strides = array<i32>} : memref<32x128xf32, #tpu.memory_space<vmem>>, vector<32x128xf32>,
    return
  }
  func.func @transform_0(%arg0: i32) -> (i32, i32) {
    %c0_i32 = arith.constant 0 : i32
    %c0_i32_0 = arith.constant 0 : i32
    return %arg0, %c0_i32 : i32, i32
  }
  func.func @transform_1(%arg0: i32) -> (i32, i32) {
    %c0_i32 = arith.constant 0 : i32
    %c0_i32_0 = arith.constant 0 : i32
    %c0_i32_1 = arith.constant 0 : i32
    return %c0_i32, %c0_i32_0 : i32, i32
  }
  func.func @transform_2(%arg0: i32) -> (i32, i32) {
    %c0_i32 = arith.constant 0 : i32
    %c0_i32_0 = arith.constant 0 : i32
    return %arg0, %c0_i32 : i32, i32
  }
}

</mosaic_0001>

<llo_original>
// kernel: tpu_custom_call.1
$region0: #{tpu_custom_call.1}
  #allocation0 [shape = 'u32[]', space=smem, size = 0x4, offset = 0x4, fixed_abs, tag = 'smem constant byte address 0x4 - core index']
  #allocation1 [shape = 'u32[144,128]{1,0:T(1,128)}', space=vmem, size = 0x12000, scoped, tag = 'internal scratch']
  %s0 = inlined_call_operand.vmem [shape: f32[32,3], index: 0, kind: input, shape index: {}]
  %s1 = inlined_call_operand.vmem [shape: f32[3,128], index: 1, kind: input, shape index: {}]
  %s2 = inlined_call_operand.hbm [shape: f32[32,128], index: 2, kind: output, shape index: {}]
  %s3 = sld [smem:[#allocation0]]
  $region18: #{tpu_custom_call.1} parent=0
    _
  %s5 = ssub.s32 1, %s3
  %s6 = scalar_select 0, %s5, %s3
  $region1: #{tpu_custom_call.1} parent=0
    #allocation2 [shape = 'u8[16384]{0}', space=vmem, size = 0x4000, scoped, tag = 'output window, operand 0, single buffered']
    #allocation3 [shape = 's32[1]{0}', space=sflag, size = 0x4, scoped, tag = 'scoped memory for tpu_custom_call.1']
    %7 = vsyncpa [#allocation3], 0
    // Predicated region
    $region2: #{tpu_custom_call.1} parent=1 // pred_check
      _
    $region3: #{tpu_custom_call.1} parent=1 // pred_check_branch
      %9 = sbr.rel (0) target = $region5
    $region4: #{tpu_custom_call.1} parent=1 // pred_region
      _
    $region5: #{tpu_custom_call.1} parent=1 // pred_fallthru
      _
    // Predicated region
    $region6: #{tpu_custom_call.1} parent=1 // pred_check
      _
    $region7: #{tpu_custom_call.1} parent=1 // pred_check_branch
      %11 = sbr.rel (0) target = $region9
    $region8: #{tpu_custom_call.1} parent=1 // pred_region
      _
    $region9: #{tpu_custom_call.1} parent=1 // pred_fallthru
      _
    %v12 = vld [vmem:[%s0] sm:$0xff]
    %v13 = vld [vmem:[%s0 + $0x8] sm:$0xff]
    %v14 = vld [vmem:[%s0 + $0x10] sm:$0xff]
    %v15 = vld [vmem:[%s0 + $0x18] sm:$0xff]
    %v16 = vld [vmem:[%s1] sm:$0x7]
    %vm17 = vcmask 23552
    %v19 = vsel %vm17, %v12, 0
    %v22 = vsel %vm17, %v13, 0
    %v25 = vsel %vm17, %v14, 0
    %v28 = vsel %vm17, %v15, 0
    %vm30 = vcmask 1042432
    %v32 = vsel %vm30, %v16, 0
    %34 = vmatprep.subr.mxu0 0.0
    %35 = vmatpush1.msra.mxu0 0.0
    %36 = vmatprep.subr.mxu0 0.0
    %37 = vmatpush1.msra.mxu0 0.0
    %38 = vmatprep.subr.mxu0 0.0
    %39 = vmatpush1.msra.mxu0 0.0
    %40 = vmatprep.subr.mxu0 0.0
    %41 = vmatpush1.msra.mxu0 0.0
    %42 = vmatprep.subr.mxu0 0.0
    %43 = vmatpush1.msra.mxu0 0.0
    %44 = vmatprep.subr.mxu0 0.0
    %45 = vmatpush1.msra.mxu0 0.0
    %46 = vmatprep.subr.mxu0 0.0
    %47 = vmatpush1.msra.mxu0 0.0
    %48 = vmatprep.subr.mxu0 0.0
    %49 = vmatpush1.msra.mxu0 0.0
    %50 = vmatprep.subr.mxu0 0.0
    %51 = vmatpush1.msra.mxu0 0.0
    %52 = vmatprep.subr.mxu0 0.0
    %53 = vmatpush1.msra.mxu0 0.0
    %54 = vmatprep.subr.mxu0 0.0
    %55 = vmatpush1.msra.mxu0 0.0
    %56 = vmatprep.subr.mxu0 0.0
    %57 = vmatpush1.msra.mxu0 0.0
    %58 = vmatprep.subr.mxu0 0.0
    %59 = vmatpush1.msra.mxu0 0.0
    %60 = vmatprep.subr.mxu0 0.0
    %61 = vmatpush1.msra.mxu0 0.0
    %62 = vmatprep.subr.mxu0 0.0
    %63 = vmatpush1.msra.mxu0 0.0
    %64 = vmatprep.subr.mxu0 0.0
    %v65 = vand.u32 %v32, 4294901760
    %66 = vmatpush1.msra.mxu0 %v65
    %67 = vmatprep.subr.mxu0 0.0
    %68 = vmatpush2.msra.mxu0 0.0
    %69 = vmatprep.subr.mxu0 0.0
    %70 = vmatpush2.msra.mxu0 0.0
    %71 = vmatprep.subr.mxu0 0.0
    %72 = vmatpush2.msra.mxu0 0.0
    %73 = vmatprep.subr.mxu0 0.0
    %74 = vmatpush2.msra.mxu0 0.0
    %75 = vmatprep.subr.mxu0 0.0
    %76 = vmatpush2.msra.mxu0 0.0
    %77 = vmatprep.subr.mxu0 0.0
    %78 = vmatpush2.msra.mxu0 0.0
    %79 = vmatprep.subr.mxu0 0.0
    %80 = vmatpush2.msra.mxu0 0.0
    %81 = vmatprep.subr.mxu0 0.0
    %82 = vmatpush2.msra.mxu0 0.0
    %83 = vmatprep.subr.mxu0 0.0
    %84 = vmatpush2.msra.mxu0 0.0
    %85 = vmatprep.subr.mxu0 0.0
    %86 = vmatpush2.msra.mxu0 0.0
    %87 = vmatprep.subr.mxu0 0.0
    %88 = vmatpush2.msra.mxu0 0.0
    %89 = vmatprep.subr.mxu0 0.0
    %90 = vmatpush2.msra.mxu0 0.0
    %91 = vmatprep.subr.mxu0 0.0
    %92 = vmatpush2.msra.mxu0 0.0
    %93 = vmatprep.subr.mxu0 0.0
    %94 = vmatpush2.msra.mxu0 0.0
    %95 = vmatprep.subr.mxu0 0.0
    %96 = vmatpush2.msra.mxu0 0.0
    %97 = vmatprep.subr.mxu0 0.0
    %98 = vmatpush2.msra.mxu0 0.0
    %99 = vmatprep.mubr.f32.mxu0 0.0
    %v100 = vand.u32 %v19, 4294901760
    %v101 = vsub.f32 %v19, %v100
    %v102 = vand.u32 %v101, 4294901760
    %v103 = vsub.f32 %v101, %v102
    %v104 = vand.u32 %v103, 4294901760
    %105 = vmatmul.mubr.f32.gmra.mxu0 %v104
    %v106 = vpop.f32.mrf.mxu0
    %v107 = vadd.f32 0.0, %v106
    %v108 = vpop.f32.mrf.mxu0
    %109 = vmatprep.mubr.f32.mxu0 0.0
    %v110 = vand.u32 %v22, 4294901760
    %v111 = vsub.f32 %v22, %v110
    %v112 = vand.u32 %v111, 4294901760
    %v113 = vsub.f32 %v111, %v112
    %v114 = vand.u32 %v113, 4294901760
    %115 = vmatmul.mubr.f32.gmra.mxu0 %v114
    %v116 = vpop.f32.mrf.mxu0
    %v117 = vadd.f32 0.0, %v116
    %v118 = vpop.f32.mrf.mxu0
    %119 = vmatprep.mubr.f32.mxu0 0.0
    %v120 = vand.u32 %v25, 4294901760
    %v121 = vsub.f32 %v25, %v120
    %v122 = vand.u32 %v121, 4294901760
    %v123 = vsub.f32 %v121, %v122
    %v124 = vand.u32 %v123, 4294901760
    %125 = vmatmul.mubr.f32.gmra.mxu0 %v124
    %v126 = vpop.f32.mrf.mxu0
    %v127 = vadd.f32 0.0, %v126
    %v128 = vpop.f32.mrf.mxu0
    %129 = vmatprep.mubr.f32.mxu0 0.0
    %v130 = vand.u32 %v28, 4294901760
    %v131 = vsub.f32 %v28, %v130
    %v132 = vand.u32 %v131, 4294901760
    %v133 = vsub.f32 %v131, %v132
    %v134 = vand.u32 %v133, 4294901760
    %135 = vmatmul.mubr.f32.gmra.mxu0 %v134
    %v136 = vpop.f32.mrf.mxu0
    %v137 = vadd.f32 0.0, %v136
    %v138 = vpop.f32.mrf.mxu0
    %139 = vdwg.mxu0
    %140 = vmatprep.subr.mxu0 0.0
    %141 = vmatpush1.msra.mxu0 0.0
    %142 = vmatprep.subr.mxu0 0.0
    %143 = vmatpush1.msra.mxu0 0.0
    %144 = vmatprep.subr.mxu0 0.0
    %145 = vmatpush1.msra.mxu0 0.0
    %146 = vmatprep.subr.mxu0 0.0
    %147 = vmatpush1.msra.mxu0 0.0
    %148 = vmatprep.subr.mxu0 0.0
    %149 = vmatpush1.msra.mxu0 0.0
    %150 = vmatprep.subr.mxu0 0.0
    %151 = vmatpush1.msra.mxu0 0.0
    %152 = vmatprep.subr.mxu0 0.0
    %153 = vmatpush1.msra.mxu0 0.0
    %154 = vmatprep.subr.mxu0 0.0
    %155 = vmatpush1.msra.mxu0 0.0
    %156 = vmatprep.subr.mxu0 0.0
    %157 = vmatpush1.msra.mxu0 0.0
    %158 = vmatprep.subr.mxu0 0.0
    %159 = vmatpush1.msra.mxu0 0.0
    %160 = vmatprep.subr.mxu0 0.0
    %161 = vmatpush1.msra.mxu0 0.0
    %162 = vmatprep.subr.mxu0 0.0
    %163 = vmatpush1.msra.mxu0 0.0
    %164 = vmatprep.subr.mxu0 0.0
    %165 = vmatpush1.msra.mxu0 0.0
    %166 = vmatprep.subr.mxu0 0.0
    %167 = vmatpush1.msra.mxu0 0.0
    %168 = vmatprep.subr.mxu0 0.0
    %169 = vmatpush1.msra.mxu0 0.0
    %170 = vmatprep.subr.mxu0 0.0
    %v171 = vand.u32 %v32, 4294901760
    %v172 = vsub.f32 %v32, %v171
    %v173 = vand.u32 %v172, 4294901760
    %v174 = vsub.f32 %v172, %v173
    %v175 = vand.u32 %v174, 4294901760
    %176 = vmatpush1.msra.mxu0 %v175
    %177 = vmatprep.subr.mxu0 0.0
    %178 = vmatpush2.msra.mxu0 0.0
    %179 = vmatprep.subr.mxu0 0.0
    %180 = vmatpush2.msra.mxu0 0.0
    %181 = vmatprep.subr.mxu0 0.0
    %182 = vmatpush2.msra.mxu0 0.0
    %183 = vmatprep.subr.mxu0 0.0
    %184 = vmatpush2.msra.mxu0 0.0
    %185 = vmatprep.subr.mxu0 0.0
    %186 = vmatpush2.msra.mxu0 0.0
    %187 = vmatprep.subr.mxu0 0.0
    %188 = vmatpush2.msra.mxu0 0.0
    %189 = vmatprep.subr.mxu0 0.0
    %190 = vmatpush2.msra.mxu0 0.0
    %191 = vmatprep.subr.mxu0 0.0
    %192 = vmatpush2.msra.mxu0 0.0
    %193 = vmatprep.subr.mxu0 0.0
    %194 = vmatpush2.msra.mxu0 0.0
    %195 = vmatprep.subr.mxu0 0.0
    %196 = vmatpush2.msra.mxu0 0.0
    %197 = vmatprep.subr.mxu0 0.0
    %198 = vmatpush2.msra.mxu0 0.0
    %199 = vmatprep.subr.mxu0 0.0
    %200 = vmatpush2.msra.mxu0 0.0
    %201 = vmatprep.subr.mxu0 0.0
    %202 = vmatpush2.msra.mxu0 0.0
    %203 = vmatprep.subr.mxu0 0.0
    %204 = vmatpush2.msra.mxu0 0.0
    %205 = vmatprep.subr.mxu0 0.0
    %206 = vmatpush2.msra.mxu0 0.0
    %207 = vmatprep.subr.mxu0 0.0
    %208 = vmatpush2.msra.mxu0 0.0
    %209 = vmatprep.mubr.f32.mxu0 0.0
    %v210 = vand.u32 %v19, 4294901760
    %211 = vmatmul.mubr.f32.gmra.mxu0 %v210
    %v212 = vpop.f32.mrf.mxu0
    %v213 = vadd.f32 %v107, %v212
    %v214 = vpop.f32.mrf.mxu0
    %215 = vmatprep.mubr.f32.mxu0 0.0
    %v216 = vand.u32 %v22, 4294901760
    %217 = vmatmul.mubr.f32.gmra.mxu0 %v216
    %v218 = vpop.f32.mrf.mxu0
    %v219 = vadd.f32 %v117, %v218
    %v220 = vpop.f32.mrf.mxu0
    %221 = vmatprep.mubr.f32.mxu0 0.0
    %v222 = vand.u32 %v25, 4294901760
    %223 = vmatmul.mubr.f32.gmra.mxu0 %v222
    %v224 = vpop.f32.mrf.mxu0
    %v225 = vadd.f32 %v127, %v224
    %v226 = vpop.f32.mrf.mxu0
    %227 = vmatprep.mubr.f32.mxu0 0.0
    %v228 = vand.u32 %v28, 4294901760
    %229 = vmatmul.mubr.f32.gmra.mxu0 %v228
    %v230 = vpop.f32.mrf.mxu0
    %v231 = vadd.f32 %v137, %v230
    %v232 = vpop.f32.mrf.mxu0
    %233 = vdwg.mxu0
    %234 = vmatprep.subr.mxu0 0.0
    %235 = vmatpush1.msra.mxu0 0.0
    %236 = vmatprep.subr.mxu0 0.0
    %237 = vmatpush1.msra.mxu0 0.0
    %238 = vmatprep.subr.mxu0 0.0
    %239 = vmatpush1.msra.mxu0 0.0
    %240 = vmatprep.subr.mxu0 0.0
    %241 = vmatpush1.msra.mxu0 0.0
    %242 = vmatprep.subr.mxu0 0.0
    %243 = vmatpush1.msra.mxu0 0.0
    %244 = vmatprep.subr.mxu0 0.0
    %245 = vmatpush1.msra.mxu0 0.0
    %246 = vmatprep.subr.mxu0 0.0
    %247 = vmatpush1.msra.mxu0 0.0
    %248 = vmatprep.subr.mxu0 0.0
    %249 = vmatpush1.msra.mxu0 0.0
    %250 = vmatprep.subr.mxu0 0.0
    %251 = vmatpush1.msra.mxu0 0.0
    %252 = vmatprep.subr.mxu0 0.0
    %253 = vmatpush1.msra.mxu0 0.0
    %254 = vmatprep.subr.mxu0 0.0
    %255 = vmatpush1.msra.mxu0 0.0
    %256 = vmatprep.subr.mxu0 0.0
    %257 = vmatpush1.msra.mxu0 0.0
    %258 = vmatprep.subr.mxu0 0.0
    %259 = vmatpush1.msra.mxu0 0.0
    %260 = vmatprep.subr.mxu0 0.0
    %261 = vmatpush1.msra.mxu0 0.0
    %262 = vmatprep.subr.mxu0 0.0
    %263 = vmatpush1.msra.mxu0 0.0
    %264 = vmatprep.subr.mxu0 0.0
    %v265 = vand.u32 %v32, 4294901760
    %v266 = vsub.f32 %v32, %v265
    %267 = vmatpush1.msra.mxu0 %v266
    %268 = vmatprep.subr.mxu0 0.0
    %269 = vmatpush2.msra.mxu0 0.0
    %270 = vmatprep.subr.mxu0 0.0
    %271 = vmatpush2.msra.mxu0 0.0
    %272 = vmatprep.subr.mxu0 0.0
    %273 = vmatpush2.msra.mxu0 0.0
    %274 = vmatprep.subr.mxu0 0.0
    %275 = vmatpush2.msra.mxu0 0.0
    %276 = vmatprep.subr.mxu0 0.0
    %277 = vmatpush2.msra.mxu0 0.0
    %278 = vmatprep.subr.mxu0 0.0
    %279 = vmatpush2.msra.mxu0 0.0
    %280 = vmatprep.subr.mxu0 0.0
    %281 = vmatpush2.msra.mxu0 0.0
    %282 = vmatprep.subr.mxu0 0.0
    %283 = vmatpush2.msra.mxu0 0.0
    %284 = vmatprep.subr.mxu0 0.0
    %285 = vmatpush2.msra.mxu0 0.0
    %286 = vmatprep.subr.mxu0 0.0
    %287 = vmatpush2.msra.mxu0 0.0
    %288 = vmatprep.subr.mxu0 0.0
    %289 = vmatpush2.msra.mxu0 0.0
    %290 = vmatprep.subr.mxu0 0.0
    %291 = vmatpush2.msra.mxu0 0.0
    %292 = vmatprep.subr.mxu0 0.0
    %293 = vmatpush2.msra.mxu0 0.0
    %294 = vmatprep.subr.mxu0 0.0
    %295 = vmatpush2.msra.mxu0 0.0
    %296 = vmatprep.subr.mxu0 0.0
    %297 = vmatpush2.msra.mxu0 0.0
    %298 = vmatprep.subr.mxu0 0.0
    %299 = vmatpush2.msra.mxu0 0.0
    %300 = vmatprep.mubr.f32.mxu0 0.0
    %v301 = vand.u32 %v19, 4294901760
    %v302 = vsub.f32 %v19, %v301
    %303 = vmatmul.mubr.f32.gmra.mxu0 %v302
    %v304 = vpop.f32.mrf.mxu0
    %v305 = vadd.f32 %v213, %v304
    %v306 = vpop.f32.mrf.mxu0
    %307 = vmatprep.mubr.f32.mxu0 0.0
    %v308 = vand.u32 %v22, 4294901760
    %v309 = vsub.f32 %v22, %v308
    %310 = vmatmul.mubr.f32.gmra.mxu0 %v309
    %v311 = vpop.f32.mrf.mxu0
    %v312 = vadd.f32 %v219, %v311
    %v313 = vpop.f32.mrf.mxu0
    %314 = vmatprep.mubr.f32.mxu0 0.0
    %v315 = vand.u32 %v25, 4294901760
    %v316 = vsub.f32 %v25, %v315
    %317 = vmatmul.mubr.f32.gmra.mxu0 %v316
    %v318 = vpop.f32.mrf.mxu0
    %v319 = vadd.f32 %v225, %v318
    %v320 = vpop.f32.mrf.mxu0
    %321 = vmatprep.mubr.f32.mxu0 0.0
    %v322 = vand.u32 %v28, 4294901760
    %v323 = vsub.f32 %v28, %v322
    %324 = vmatmul.mubr.f32.gmra.mxu0 %v323
    %v325 = vpop.f32.mrf.mxu0
    %v326 = vadd.f32 %v231, %v325
    %v327 = vpop.f32.mrf.mxu0
    %328 = vdwg.mxu0
    %329 = vmatprep.subr.mxu0 0.0
    %330 = vmatpush1.msra.mxu0 0.0
    %331 = vmatprep.subr.mxu0 0.0
    %332 = vmatpush1.msra.mxu0 0.0
    %333 = vmatprep.subr.mxu0 0.0
    %334 = vmatpush1.msra.mxu0 0.0
    %335 = vmatprep.subr.mxu0 0.0
    %336 = vmatpush1.msra.mxu0 0.0
    %337 = vmatprep.subr.mxu0 0.0
    %338 = vmatpush1.msra.mxu0 0.0
    %339 = vmatprep.subr.mxu0 0.0
    %340 = vmatpush1.msra.mxu0 0.0
    %341 = vmatprep.subr.mxu0 0.0
    %342 = vmatpush1.msra.mxu0 0.0
    %343 = vmatprep.subr.mxu0 0.0
    %344 = vmatpush1.msra.mxu0 0.0
    %345 = vmatprep.subr.mxu0 0.0
    %346 = vmatpush1.msra.mxu0 0.0
    %347 = vmatprep.subr.mxu0 0.0
    %348 = vmatpush1.msra.mxu0 0.0
    %349 = vmatprep.subr.mxu0 0.0
    %350 = vmatpush1.msra.mxu0 0.0
    %351 = vmatprep.subr.mxu0 0.0
    %352 = vmatpush1.msra.mxu0 0.0
    %353 = vmatprep.subr.mxu0 0.0
    %354 = vmatpush1.msra.mxu0 0.0
    %355 = vmatprep.subr.mxu0 0.0
    %356 = vmatpush1.msra.mxu0 0.0
    %357 = vmatprep.subr.mxu0 0.0
    %358 = vmatpush1.msra.mxu0 0.0
    %359 = vmatprep.subr.mxu0 0.0
    %v360 = vand.u32 %v32, 4294901760
    %361 = vmatpush1.msra.mxu0 %v360
    %362 = vmatprep.subr.mxu0 0.0
    %363 = vmatpush2.msra.mxu0 0.0
    %364 = vmatprep.subr.mxu0 0.0
    %365 = vmatpush2.msra.mxu0 0.0
    %366 = vmatprep.subr.mxu0 0.0
    %367 = vmatpush2.msra.mxu0 0.0
    %368 = vmatprep.subr.mxu0 0.0
    %369 = vmatpush2.msra.mxu0 0.0
    %370 = vmatprep.subr.mxu0 0.0
    %371 = vmatpush2.msra.mxu0 0.0
    %372 = vmatprep.subr.mxu0 0.0
    %373 = vmatpush2.msra.mxu0 0.0
    %374 = vmatprep.subr.mxu0 0.0
    %375 = vmatpush2.msra.mxu0 0.0
    %376 = vmatprep.subr.mxu0 0.0
    %377 = vmatpush2.msra.mxu0 0.0
    %378 = vmatprep.subr.mxu0 0.0
    %379 = vmatpush2.msra.mxu0 0.0
    %380 = vmatprep.subr.mxu0 0.0
    %381 = vmatpush2.msra.mxu0 0.0
    %382 = vmatprep.subr.mxu0 0.0
    %383 = vmatpush2.msra.mxu0 0.0
    %384 = vmatprep.subr.mxu0 0.0
    %385 = vmatpush2.msra.mxu0 0.0
    %386 = vmatprep.subr.mxu0 0.0
    %387 = vmatpush2.msra.mxu0 0.0
    %388 = vmatprep.subr.mxu0 0.0
    %389 = vmatpush2.msra.mxu0 0.0
    %390 = vmatprep.subr.mxu0 0.0
    %391 = vmatpush2.msra.mxu0 0.0
    %392 = vmatprep.subr.mxu0 0.0
    %393 = vmatpush2.msra.mxu0 0.0
    %394 = vmatprep.mubr.f32.mxu0 0.0
    %v395 = vand.u32 %v19, 4294901760
    %v396 = vsub.f32 %v19, %v395
    %v397 = vand.u32 %v396, 4294901760
    %398 = vmatmul.mubr.f32.gmra.mxu0 %v397
    %v399 = vpop.f32.mrf.mxu0
    %v400 = vadd.f32 %v305, %v399
    %v401 = vpop.f32.mrf.mxu0
    %402 = vmatprep.mubr.f32.mxu0 0.0
    %v403 = vand.u32 %v22, 4294901760
    %v404 = vsub.f32 %v22, %v403
    %v405 = vand.u32 %v404, 4294901760
    %406 = vmatmul.mubr.f32.gmra.mxu0 %v405
    %v407 = vpop.f32.mrf.mxu0
    %v408 = vadd.f32 %v312, %v407
    %v409 = vpop.f32.mrf.mxu0
    %410 = vmatprep.mubr.f32.mxu0 0.0
    %v411 = vand.u32 %v25, 4294901760
    %v412 = vsub.f32 %v25, %v411
    %v413 = vand.u32 %v412, 4294901760
    %414 = vmatmul.mubr.f32.gmra.mxu0 %v413
    %v415 = vpop.f32.mrf.mxu0
    %v416 = vadd.f32 %v319, %v415
    %v417 = vpop.f32.mrf.mxu0
    %418 = vmatprep.mubr.f32.mxu0 0.0
    %v419 = vand.u32 %v28, 4294901760
    %v420 = vsub.f32 %v28, %v419
    %v421 = vand.u32 %v420, 4294901760
    %422 = vmatmul.mubr.f32.gmra.mxu0 %v421
    %v423 = vpop.f32.mrf.mxu0
    %v424 = vadd.f32 %v326, %v423
    %v425 = vpop.f32.mrf.mxu0
    %426 = vdwg.mxu0
    %427 = vmatprep.subr.mxu0 0.0
    %428 = vmatpush1.msra.mxu0 0.0
    %429 = vmatprep.subr.mxu0 0.0
    %430 = vmatpush1.msra.mxu0 0.0
    %431 = vmatprep.subr.mxu0 0.0
    %432 = vmatpush1.msra.mxu0 0.0
    %433 = vmatprep.subr.mxu0 0.0
    %434 = vmatpush1.msra.mxu0 0.0
    %435 = vmatprep.subr.mxu0 0.0
    %436 = vmatpush1.msra.mxu0 0.0
    %437 = vmatprep.subr.mxu0 0.0
    %438 = vmatpush1.msra.mxu0 0.0
    %439 = vmatprep.subr.mxu0 0.0
    %440 = vmatpush1.msra.mxu0 0.0
    %441 = vmatprep.subr.mxu0 0.0
    %442 = vmatpush1.msra.mxu0 0.0
    %443 = vmatprep.subr.mxu0 0.0
    %444 = vmatpush1.msra.mxu0 0.0
    %445 = vmatprep.subr.mxu0 0.0
    %446 = vmatpush1.msra.mxu0 0.0
    %447 = vmatprep.subr.mxu0 0.0
    %448 = vmatpush1.msra.mxu0 0.0
    %449 = vmatprep.subr.mxu0 0.0
    %450 = vmatpush1.msra.mxu0 0.0
    %451 = vmatprep.subr.mxu0 0.0
    %452 = vmatpush1.msra.mxu0 0.0
    %453 = vmatprep.subr.mxu0 0.0
    %454 = vmatpush1.msra.mxu0 0.0
    %455 = vmatprep.subr.mxu0 0.0
    %456 = vmatpush1.msra.mxu0 0.0
    %457 = vmatprep.subr.mxu0 0.0
    %v458 = vand.u32 %v32, 4294901760
    %v459 = vsub.f32 %v32, %v458
    %v460 = vand.u32 %v459, 4294901760
    %461 = vmatpush1.msra.mxu0 %v460
    %462 = vmatprep.subr.mxu0 0.0
    %463 = vmatpush2.msra.mxu0 0.0
    %464 = vmatprep.subr.mxu0 0.0
    %465 = vmatpush2.msra.mxu0 0.0
    %466 = vmatprep.subr.mxu0 0.0
    %467 = vmatpush2.msra.mxu0 0.0
    %468 = vmatprep.subr.mxu0 0.0
    %469 = vmatpush2.msra.mxu0 0.0
    %470 = vmatprep.subr.mxu0 0.0
    %471 = vmatpush2.msra.mxu0 0.0
    %472 = vmatprep.subr.mxu0 0.0
    %473 = vmatpush2.msra.mxu0 0.0
    %474 = vmatprep.subr.mxu0 0.0
    %475 = vmatpush2.msra.mxu0 0.0
    %476 = vmatprep.subr.mxu0 0.0
    %477 = vmatpush2.msra.mxu0 0.0
    %478 = vmatprep.subr.mxu0 0.0
    %479 = vmatpush2.msra.mxu0 0.0
    %480 = vmatprep.subr.mxu0 0.0
    %481 = vmatpush2.msra.mxu0 0.0
    %482 = vmatprep.subr.mxu0 0.0
    %483 = vmatpush2.msra.mxu0 0.0
    %484 = vmatprep.subr.mxu0 0.0
    %485 = vmatpush2.msra.mxu0 0.0
    %486 = vmatprep.subr.mxu0 0.0
    %487 = vmatpush2.msra.mxu0 0.0
    %488 = vmatprep.subr.mxu0 0.0
    %489 = vmatpush2.msra.mxu0 0.0
    %490 = vmatprep.subr.mxu0 0.0
    %491 = vmatpush2.msra.mxu0 0.0
    %492 = vmatprep.subr.mxu0 0.0
    %493 = vmatpush2.msra.mxu0 0.0
    %494 = vmatprep.mubr.f32.mxu0 0.0
    %v495 = vand.u32 %v19, 4294901760
    %496 = vmatmul.mubr.f32.gmra.mxu0 %v495
    %v497 = vpop.f32.mrf.mxu0
    %v498 = vadd.f32 %v400, %v497
    %v499 = vpop.f32.mrf.mxu0
    %500 = vmatprep.mubr.f32.mxu0 0.0
    %v501 = vand.u32 %v22, 4294901760
    %502 = vmatmul.mubr.f32.gmra.mxu0 %v501
    %v503 = vpop.f32.mrf.mxu0
    %v504 = vadd.f32 %v408, %v503
    %v505 = vpop.f32.mrf.mxu0
    %506 = vmatprep.mubr.f32.mxu0 0.0
    %v507 = vand.u32 %v25, 4294901760
    %508 = vmatmul.mubr.f32.gmra.mxu0 %v507
    %v509 = vpop.f32.mrf.mxu0
    %v510 = vadd.f32 %v416, %v509
    %v511 = vpop.f32.mrf.mxu0
    %512 = vmatprep.mubr.f32.mxu0 0.0
    %v513 = vand.u32 %v28, 4294901760
    %514 = vmatmul.mubr.f32.gmra.mxu0 %v513
    %v515 = vpop.f32.mrf.mxu0
    %v516 = vadd.f32 %v424, %v515
    %v517 = vpop.f32.mrf.mxu0
    %518 = vdwg.mxu0
    %519 = vmatprep.subr.mxu0 0.0
    %520 = vmatpush1.msra.mxu0 0.0
    %521 = vmatprep.subr.mxu0 0.0
    %522 = vmatpush1.msra.mxu0 0.0
    %523 = vmatprep.subr.mxu0 0.0
    %524 = vmatpush1.msra.mxu0 0.0
    %525 = vmatprep.subr.mxu0 0.0
    %526 = vmatpush1.msra.mxu0 0.0
    %527 = vmatprep.subr.mxu0 0.0
    %528 = vmatpush1.msra.mxu0 0.0
    %529 = vmatprep.subr.mxu0 0.0
    %530 = vmatpush1.msra.mxu0 0.0
    %531 = vmatprep.subr.mxu0 0.0
    %532 = vmatpush1.msra.mxu0 0.0
    %533 = vmatprep.subr.mxu0 0.0
    %534 = vmatpush1.msra.mxu0 0.0
    %535 = vmatprep.subr.mxu0 0.0
    %536 = vmatpush1.msra.mxu0 0.0
    %537 = vmatprep.subr.mxu0 0.0
    %538 = vmatpush1.msra.mxu0 0.0
    %539 = vmatprep.subr.mxu0 0.0
    %540 = vmatpush1.msra.mxu0 0.0
    %541 = vmatprep.subr.mxu0 0.0
    %542 = vmatpush1.msra.mxu0 0.0
    %543 = vmatprep.subr.mxu0 0.0
    %544 = vmatpush1.msra.mxu0 0.0
    %545 = vmatprep.subr.mxu0 0.0
    %546 = vmatpush1.msra.mxu0 0.0
    %547 = vmatprep.subr.mxu0 0.0
    %548 = vmatpush1.msra.mxu0 0.0
    %549 = vmatprep.subr.mxu0 0.0
    %v550 = vand.u32 %v32, 4294901760
    %551 = vmatpush1.msra.mxu0 %v550
    %552 = vmatprep.subr.mxu0 0.0
    %553 = vmatpush2.msra.mxu0 0.0
    %554 = vmatprep.subr.mxu0 0.0
    %555 = vmatpush2.msra.mxu0 0.0
    %556 = vmatprep.subr.mxu0 0.0
    %557 = vmatpush2.msra.mxu0 0.0
    %558 = vmatprep.subr.mxu0 0.0
    %559 = vmatpush2.msra.mxu0 0.0
    %560 = vmatprep.subr.mxu0 0.0
    %561 = vmatpush2.msra.mxu0 0.0
    %562 = vmatprep.subr.mxu0 0.0
    %563 = vmatpush2.msra.mxu0 0.0
    %564 = vmatprep.subr.mxu0 0.0
    %565 = vmatpush2.msra.mxu0 0.0
    %566 = vmatprep.subr.mxu0 0.0
    %567 = vmatpush2.msra.mxu0 0.0
    %568 = vmatprep.subr.mxu0 0.0
    %569 = vmatpush2.msra.mxu0 0.0
    %570 = vmatprep.subr.mxu0 0.0
    %571 = vmatpush2.msra.mxu0 0.0
    %572 = vmatprep.subr.mxu0 0.0
    %573 = vmatpush2.msra.mxu0 0.0
    %574 = vmatprep.subr.mxu0 0.0
    %575 = vmatpush2.msra.mxu0 0.0
    %576 = vmatprep.subr.mxu0 0.0
    %577 = vmatpush2.msra.mxu0 0.0
    %578 = vmatprep.subr.mxu0 0.0
    %579 = vmatpush2.msra.mxu0 0.0
    %580 = vmatprep.subr.mxu0 0.0
    %581 = vmatpush2.msra.mxu0 0.0
    %582 = vmatprep.subr.mxu0 0.0
    %583 = vmatpush2.msra.mxu0 0.0
    %584 = vmatprep.mubr.f32.mxu0 0.0
    %v585 = vand.u32 %v19, 4294901760
    %586 = vmatmul.mubr.f32.gmra.mxu0 %v585
    %v587 = vpop.f32.mrf.mxu0
    %v588 = vadd.f32 %v498, %v587
    %v589 = vpop.f32.mrf.mxu0
    %590 = vmatprep.mubr.f32.mxu0 0.0
    %v591 = vand.u32 %v22, 4294901760
    %592 = vmatmul.mubr.f32.gmra.mxu0 %v591
    %v593 = vpop.f32.mrf.mxu0
    %v594 = vadd.f32 %v504, %v593
    %v595 = vpop.f32.mrf.mxu0
    %596 = vmatprep.mubr.f32.mxu0 0.0
    %v597 = vand.u32 %v25, 4294901760
    %598 = vmatmul.mubr.f32.gmra.mxu0 %v597
    %v599 = vpop.f32.mrf.mxu0
    %v600 = vadd.f32 %v510, %v599
    %v601 = vpop.f32.mrf.mxu0
    %602 = vmatprep.mubr.f32.mxu0 0.0
    %v603 = vand.u32 %v28, 4294901760
    %604 = vmatmul.mubr.f32.gmra.mxu0 %v603
    %v605 = vpop.f32.mrf.mxu0
    %v606 = vadd.f32 %v516, %v605
    %v607 = vpop.f32.mrf.mxu0
    %608 = vdwg.mxu0
    %609 = vst [vmem:[#allocation2] sm:$0xff] %v588
    %610 = vst [vmem:[#allocation2 + $0x8] sm:$0xff] %v594
    %611 = vst [vmem:[#allocation2 + $0x10] sm:$0xff] %v600
    %612 = vst [vmem:[#allocation2 + $0x18] sm:$0xff] %v606
    // Predicated region
    $region10: #{tpu_custom_call.1} parent=1 // pred_check
      _
    $region11: #{tpu_custom_call.1} parent=1 // pred_check_branch
      %614 = sbr.rel (0) target = $region13
    $region12: #{tpu_custom_call.1} parent=1 // pred_region
      %s616 = ssub.s32 512, 512
      %617 = vsyncadd [#allocation3], %s616
      %s618 = sshll.u32 [#allocation2], 4
      %s619 = int_to_ptr.vmem [resolvable:$true] %s618
      %624 = dma.vmem_to_hbm [thread:$0]  %s619, 512, %s2, [#allocation3], 128, 128, 8
    $region13: #{tpu_custom_call.1} parent=1 // pred_fallthru
      _
    // Predicated region
    $region14: #{tpu_custom_call.1} parent=1 // pred_check
      _
    $region15: #{tpu_custom_call.1} parent=1 // pred_check_branch
      %626 = sbr.rel (0) target = $region17
    $region16: #{tpu_custom_call.1} parent=1 // pred_region
      %627 = dma.done [#allocation3], 512
    $region17: #{tpu_custom_call.1} parent=1 // pred_fallthru
      _
    %628 = vsyncpa [#allocation3], 1

</llo_original>
